<compile_context>
chip_gen: v7x
topology: tpu7x:2x2x1
jax: 0.10.0
libtpu: 0.0.40
codegen_flags: <defaults>
</compile_context>

<pallas_src>
import functools

import jax
import jax.numpy as jnp
from jax.experimental import pallas as pl
from jax.experimental.pallas import tpu as pltpu


def _round_up(n: int, m: int) -> int:
    return ((n + m - 1) // m) * m


def _choose_tile_b(B: int, tile_b: int) -> int:
    """Pick the batch tile: big enough to amortize step overhead, small enough
    for v7x VMEM (64 MiB physical) and >=4 grid steps on large batches."""
    tb = min(int(tile_b), 8192)                      # VMEM cap (lane-padded f32)
    if B >= 4096:                                    # keep >=4 steps for v7x's 2 TCs
        tb = min(tb, _round_up(pl.cdiv(B, 4), 8))
    tb = max(8, _round_up(min(tb, B), 8))            # multiple of 8 sublanes
    return tb


def _priornet_kernel(x_ref, w1_ref, b1_ref, w2_ref, b2_ref, out_ref, *,
                     matmul_dtype):
    """Fused 2-layer MLP on one batch tile: relu(x @ W1 + b1) @ W2 + b2."""
    x = x_ref[...]
    if matmul_dtype is not None:
        x = x.astype(matmul_dtype)                   # per-tile cast (no extra HBM pass)
    # Layer 1 on the MXU with f32 accumulation; bias + ReLU on the VPU in f32.
    h = jnp.dot(x, w1_ref[...], preferred_element_type=jnp.float32)
    h = jnp.maximum(h + b1_ref[...], 0.0)
    # Layer 2 on the MXU; bias add in f32.  Output block is lane-full (width k).
    logits = jnp.dot(h.astype(w2_ref.dtype), w2_ref[...],
                     preferred_element_type=jnp.float32) + b2_ref[...]
    out_ref[...] = logits.astype(out_ref.dtype)


def priornet_forward(x, params, *, tile_b: int = 8192, matmul_dtype=None,
                     min_pallas_batch: int = 2048):
    """JAX wrapper reproducing PriorNet.forward (returns treatment logits).

    x: [B, d_x] float32.  params = (w1 [d_x,H], b1 [1,H], w2 [H,k], b2 [1,k]).
    matmul_dtype: optional narrower dtype (e.g. jnp.bfloat16) for the matmul
    operands only; accumulation, biases, ReLU and the output stay float32.
    min_pallas_batch: below this row count route through plain XLA (fused GEMM
    beats kernel launch overhead for tiny batches).
    """
    w1, b1, w2, b2 = params
    B, d_x = x.shape
    hidden = w1.shape[1]
    k = w2.shape[1]

    b1 = b1.astype(jnp.float32)
    b2 = b2.astype(jnp.float32)
    if matmul_dtype is not None:
        # Weights are tiny (<=~20 KB): cast once, fetched once by the kernel.
        w1 = w1.astype(matmul_dtype)
        w2 = w2.astype(matmul_dtype)

    if B < min_pallas_batch:
        # Small-batch XLA fallback (same math / same casts as the kernel).
        xm = x.astype(matmul_dtype) if matmul_dtype is not None else x
        h = jnp.maximum(
            jnp.dot(xm, w1, preferred_element_type=jnp.float32) + b1, 0.0)
        out = jnp.dot(h.astype(w2.dtype), w2,
                      preferred_element_type=jnp.float32) + b2
        return out.astype(jnp.float32)

    tb = _choose_tile_b(B, tile_b)
    grid = (pl.cdiv(B, tb),)                         # partial last block is masked

    bytes_accessed = (B * d_x * x.dtype.itemsize + B * k * 4
                      + (d_x * hidden + hidden + hidden * k + k) * w1.dtype.itemsize)
    cost = pl.CostEstimate(flops=2 * B * (d_x * hidden + hidden * k),
                           transcendentals=0,
                           bytes_accessed=bytes_accessed)

    kernel = functools.partial(_priornet_kernel, matmul_dtype=matmul_dtype)

    out = pl.pallas_call(
        kernel,
        out_shape=jax.ShapeDtypeStruct((B, k), jnp.float32),
        grid=grid,
        in_specs=[
            # x: streamed row tiles (double-buffered by the Pallas pipeline).
            pl.BlockSpec((tb, d_x), lambda i: (i, 0)),
            # Weights / biases: constant block index -> fetched once, resident.
            pl.BlockSpec((d_x, hidden), lambda i: (0, 0)),
            pl.BlockSpec((1, hidden), lambda i: (0, 0)),
            pl.BlockSpec((hidden, k), lambda i: (0, 0)),
            pl.BlockSpec((1, k), lambda i: (0, 0)),
        ],
        out_specs=pl.BlockSpec((tb, k), lambda i: (i, 0)),
        compiler_params=pltpu.CompilerParams(
            dimension_semantics=("parallel",),       # v7x: shard steps over 2 TCs
            vmem_limit_bytes=32 * 1024 * 1024,       # safe on v5e/v6e/v7x
        ),
        cost_estimate=cost,
    )(x, w1, b1, w2, b2)

    return out


def init_params(key, d_x, hidden, k):
    """Deterministic synthetic parameters (PyTorch-Linear-style uniform init)."""
    k1, k2, k3, k4 = jax.random.split(key, 4)
    lim1 = 1.0 / (d_x ** 0.5)
    lim2 = 1.0 / (hidden ** 0.5)
    w1 = jax.random.uniform(k1, (d_x, hidden), jnp.float32, -lim1, lim1)
    b1 = jax.random.uniform(k2, (1, hidden), jnp.float32, -lim1, lim1)
    w2 = jax.random.uniform(k3, (hidden, k), jnp.float32, -lim2, lim2)
    b2 = jax.random.uniform(k4, (1, k), jnp.float32, -lim2, lim2)
    return w1, b1, w2, b2


if __name__ == "__main__":
    # Small shapes consistent with the module: d_x=16 covariates, k=4
    # treatments, hidden=64 (default hidden_dims=(64,)), batch=8.
    d_x, k, hidden, B = 16, 4, 64, 8

    key = jax.random.PRNGKey(0)
    kx, kx2, kp = jax.random.split(key, 3)
    x = jax.random.normal(kx, (B, d_x), dtype=jnp.float32)
    params = init_params(kp, d_x, hidden, k)
    w1, b1, w2, b2 = params

    # --- exact f32 path, single tile (force Pallas despite tiny batch) ------
    fwd = jax.jit(functools.partial(priornet_forward, min_pallas_batch=0))
    logits = fwd(x, params)
    jax.block_until_ready(logits)

    ref = jnp.maximum(x @ w1 + b1, 0.0) @ w2 + b2
    assert logits.shape == (B, k)
    assert jnp.allclose(logits, ref, atol=1e-5), "logits mismatch (f32 path)"

    # --- multi-tile grid with partial last block (no padding) + bf16 matmul -
    B2 = 200  # cdiv(200, 64) = 4 steps, last block only 8 valid rows
    x2 = jax.random.normal(kx2, (B2, d_x), dtype=jnp.float32)
    fwd_bf16 = jax.jit(functools.partial(
        priornet_forward, tile_b=64, matmul_dtype=jnp.bfloat16,
        min_pallas_batch=0))
    logits2 = fwd_bf16(x2, params)
    jax.block_until_ready(logits2)

    ref2 = jnp.maximum(x2 @ w1 + b1, 0.0) @ w2 + b2
    assert logits2.shape == (B2, k)
    assert jnp.allclose(logits2, ref2, atol=5e-2, rtol=5e-2), \
        "logits mismatch (bf16 matmul path)"

    # --- default small-batch XLA fallback (same semantics) ------------------
    logits3 = jax.jit(priornet_forward)(x, params)
    jax.block_until_ready(logits3)
    assert jnp.allclose(logits3, ref, atol=1e-5), "logits mismatch (XLA fallback)"

    print("KERNEL_OK")
</pallas_src>

<mosaic_0001>
module attributes {stable_mosaic.version = 11 : i64} {
  func.func @_priornet_kernel(%arg0: i32, %arg1: memref<8x16xf32, #tpu.memory_space<vmem>>, %arg2: memref<16x64xf32, #tpu.memory_space<vmem>>, %arg3: memref<1x64xf32, #tpu.memory_space<vmem>>, %arg4: memref<64x4xf32, #tpu.memory_space<vmem>>, %arg5: memref<1x4xf32, #tpu.memory_space<vmem>>, %arg6: memref<8x4xf32, #tpu.memory_space<vmem>>) attributes {dimension_semantics = [#tpu.dimension_semantics<parallel>], iteration_bounds = array<i64: 1>, scalar_prefetch = 0 : i64, scratch_operands = 0 : i64, tpu.core_type = #tpu.core_type<tc>, window_params = [{transform_indices = @transform_0, window_bounds = array<i64: 8, 16>}, {pipeline_mode = #tpu.pipeline_mode<synchronous>, transform_indices = @transform_1, window_bounds = array<i64: 16, 64>}, {pipeline_mode = #tpu.pipeline_mode<synchronous>, transform_indices = @transform_2, window_bounds = array<i64: 1, 64>}, {pipeline_mode = #tpu.pipeline_mode<synchronous>, transform_indices = @transform_3, window_bounds = array<i64: 64, 4>}, {pipeline_mode = #tpu.pipeline_mode<synchronous>, transform_indices = @transform_4, window_bounds = array<i64: 1, 4>}, {transform_indices = @transform_5, window_bounds = array<i64: 8, 4>}]} {
    %c0 = arith.constant 0 : index
    %c0_0 = arith.constant 0 : index
    %0 = vector.load %arg1[%c0, %c0_0] : memref<8x16xf32, #tpu.memory_space<vmem>>, vector<8x16xf32>
    %c0_1 = arith.constant 0 : index
    %c0_2 = arith.constant 0 : index
    %1 = vector.load %arg2[%c0_1, %c0_2] : memref<16x64xf32, #tpu.memory_space<vmem>>, vector<16x64xf32>
    %cst = arith.constant dense<0.000000e+00> : vector<8x64xf32>
    %2 = tpu.matmul %0, %1, %cst {dimension_numbers = #tpu.dot_dimension_numbers<[1], [0], [0], [1], [0, 0, 1, 1], [], []>} : vector<8x16xf32>, vector<16x64xf32>, vector<8x64xf32> -> vector<8x64xf32>
    %c0_3 = arith.constant 0 : index
    %c0_4 = arith.constant 0 : index
    %3 = vector.load %arg3[%c0_3, %c0_4] : memref<1x64xf32, #tpu.memory_space<vmem>>, vector<1x64xf32>
    %4 = vector.broadcast %3 : vector<1x64xf32> to vector<8x64xf32>
    %5 = arith.addf %2, %4 : vector<8x64xf32>
    %cst_5 = arith.constant 0.000000e+00 : f32
    %6 = vector.broadcast %cst_5 : f32 to vector<8x64xf32>
    %7 = arith.maximumf %5, %6 : vector<8x64xf32>
    %c0_6 = arith.constant 0 : index
    %c0_7 = arith.constant 0 : index
    %8 = vector.load %arg4[%c0_6, %c0_7] : memref<64x4xf32, #tpu.memory_space<vmem>>, vector<64x4xf32>
    %cst_8 = arith.constant dense<0.000000e+00> : vector<8x4xf32>
    %9 = tpu.matmul %7, %8, %cst_8 {dimension_numbers = #tpu.dot_dimension_numbers<[1], [0], [0], [1], [0, 0, 1, 1], [], []>} : vector<8x64xf32>, vector<64x4xf32>, vector<8x4xf32> -> vector<8x4xf32>
    %c0_9 = arith.constant 0 : index
    %c0_10 = arith.constant 0 : index
    %10 = vector.load %arg5[%c0_9, %c0_10] : memref<1x4xf32, #tpu.memory_space<vmem>>, vector<1x4xf32>
    %11 = vector.broadcast %10 : vector<1x4xf32> to vector<8x4xf32>
    %12 = arith.addf %9, %11 : vector<8x4xf32>
    %c0_11 = arith.constant 0 : index
    %c0_12 = arith.constant 0 : index
    %13 = vector.load %arg6[%c0_11, %c0_12] : memref<8x4xf32, #tpu.memory_space<vmem>>, vector<8x4xf32>
    tpu.vector_store %arg6[%c0_11, %c0_12], %12 {strides = array<i32>} : memref<8x4xf32, #tpu.memory_space<vmem>>, vector<8x4xf32>,
    return
  }
  func.func @transform_0(%arg0: i32) -> (i32, i32) {
    %c0_i32 = arith.constant 0 : i32
    %c0_i32_0 = arith.constant 0 : i32
    return %arg0, %c0_i32 : i32, i32
  }
  func.func @transform_1(%arg0: i32) -> (i32, i32) {
    %c0_i32 = arith.constant 0 : i32
    %c0_i32_0 = arith.constant 0 : i32
    %c0_i32_1 = arith.constant 0 : i32
    return %c0_i32, %c0_i32_0 : i32, i32
  }
  func.func @transform_2(%arg0: i32) -> (i32, i32) {
    %c0_i32 = arith.constant 0 : i32
    %c0_i32_0 = arith.constant 0 : i32
    %c0_i32_1 = arith.constant 0 : i32
    return %c0_i32, %c0_i32_0 : i32, i32
  }
  func.func @transform_3(%arg0: i32) -> (i32, i32) {
    %c0_i32 = arith.constant 0 : i32
    %c0_i32_0 = arith.constant 0 : i32
    %c0_i32_1 = arith.constant 0 : i32
    return %c0_i32, %c0_i32_0 : i32, i32
  }
  func.func @transform_4(%arg0: i32) -> (i32, i32) {
    %c0_i32 = arith.constant 0 : i32
    %c0_i32_0 = arith.constant 0 : i32
    %c0_i32_1 = arith.constant 0 : i32
    return %c0_i32, %c0_i32_0 : i32, i32
  }
  func.func @transform_5(%arg0: i32) -> (i32, i32) {
    %c0_i32 = arith.constant 0 : i32
    %c0_i32_0 = arith.constant 0 : i32
    return %arg0, %c0_i32 : i32, i32
  }
}

</mosaic_0001>

<llo_original>
// kernel: priornet_forward.1
$region0: #{priornet_forward.1}
  #allocation0 [shape = 'u32[]', space=smem, size = 0x4, offset = 0x4, fixed_abs, tag = 'smem constant byte address 0x4 - core index']
  #allocation1 [shape = 'u32[144,128]{1,0:T(1,128)}', space=vmem, size = 0x12000, scoped, tag = 'internal scratch']
  %s0 = inlined_call_operand.vmem [shape: f32[8,16], index: 0, kind: input, shape index: {}]
  %s1 = inlined_call_operand.vmem [shape: f32[16,64], index: 1, kind: input, shape index: {}]
  %s2 = inlined_call_operand.vmem [shape: f32[1,64], index: 2, kind: input, shape index: {}]
  %s3 = inlined_call_operand.vmem [shape: f32[64,4], index: 3, kind: input, shape index: {}]
  %s4 = inlined_call_operand.vmem [shape: f32[1,4], index: 4, kind: input, shape index: {}]
  %s5 = inlined_call_operand.vmem [shape: f32[8,4], index: 5, kind: output, shape index: {}]
  %s6 = sld [smem:[#allocation0]]
  $region30: #{priornet_forward.1} parent=0
    _
  %s8 = ssub.s32 1, %s6
  %s9 = scalar_select 0, %s8, %s6
  // Predicated region
  $region2: #{priornet_forward.1} parent=0 // pred_check
    _
  $region3: #{priornet_forward.1} parent=0 // pred_check_branch
    %11 = sbr.rel (0) target = $region5
  $region4: #{priornet_forward.1} parent=0 // pred_region
    _
  $region5: #{priornet_forward.1} parent=0 // pred_fallthru
    _
  // Predicated region
  $region6: #{priornet_forward.1} parent=0 // pred_check
    _
  $region7: #{priornet_forward.1} parent=0 // pred_check_branch
    %13 = sbr.rel (0) target = $region9
  $region8: #{priornet_forward.1} parent=0 // pred_region
    _
  $region9: #{priornet_forward.1} parent=0 // pred_fallthru
    _
  // Predicated region
  $region10: #{priornet_forward.1} parent=0 // pred_check
    _
  $region11: #{priornet_forward.1} parent=0 // pred_check_branch
    %15 = sbr.rel (0) target = $region13
  $region12: #{priornet_forward.1} parent=0 // pred_region
    _
  $region13: #{priornet_forward.1} parent=0 // pred_fallthru
    _
  // Predicated region
  $region14: #{priornet_forward.1} parent=0 // pred_check
    _
  $region15: #{priornet_forward.1} parent=0 // pred_check_branch
    %17 = sbr.rel (0) target = $region17
  $region16: #{priornet_forward.1} parent=0 // pred_region
    _
  $region17: #{priornet_forward.1} parent=0 // pred_fallthru
    _
  // Predicated region
  $region18: #{priornet_forward.1} parent=0 // pred_check
    _
  $region19: #{priornet_forward.1} parent=0 // pred_check_branch
    %19 = sbr.rel (0) target = $region21
  $region20: #{priornet_forward.1} parent=0 // pred_region
    _
  $region21: #{priornet_forward.1} parent=0 // pred_fallthru
    _
  %v20 = vld [vmem:[%s0] sm:$0xff]
  %v21 = vld [vmem:[%s1] sm:$0xff]
  %v22 = vld [vmem:[%s1 + $0x8] sm:$0xff]
  %v23 = vld [vmem:[%s2] sm:$0x1]
  %v25 = vlaneseq
  %v26 = vshrl.u32 %v25, 7
  %v27 = vsub.s32 0, %v26
  %v28 = vrot.slane %v23, %v27
  %vm30 = vcmask 130048
  %v32 = vsel %vm30, %v20, 0
  %34 = vmatprep.subr.mxu0 0.0
  %35 = vmatpush1.msra.mxu0 %v21
  %36 = vmatprep.subr.mxu0 0.0
  %37 = vmatpush1.msra.mxu0 %v22
  %38 = vmatprep.subr.mxu0 0.0
  %39 = vmatpush1.msra.mxu0 0.0
  %40 = vmatprep.subr.mxu0 0.0
  %41 = vmatpush1.msra.mxu0 0.0
  %42 = vmatprep.subr.mxu0 0.0
  %43 = vmatpush1.msra.mxu0 0.0
  %44 = vmatprep.subr.mxu0 0.0
  %45 = vmatpush1.msra.mxu0 0.0
  %46 = vmatprep.subr.mxu0 0.0
  %47 = vmatpush1.msra.mxu0 0.0
  %48 = vmatprep.subr.mxu0 0.0
  %49 = vmatpush1.msra.mxu0 0.0
  %50 = vmatprep.subr.mxu0 0.0
  %51 = vmatpush1.msra.mxu0 0.0
  %52 = vmatprep.subr.mxu0 0.0
  %53 = vmatpush1.msra.mxu0 0.0
  %54 = vmatprep.subr.mxu0 0.0
  %55 = vmatpush1.msra.mxu0 0.0
  %56 = vmatprep.subr.mxu0 0.0
  %57 = vmatpush1.msra.mxu0 0.0
  %58 = vmatprep.subr.mxu0 0.0
  %59 = vmatpush1.msra.mxu0 0.0
  %60 = vmatprep.subr.mxu0 0.0
  %61 = vmatpush1.msra.mxu0 0.0
  %62 = vmatprep.subr.mxu0 0.0
  %63 = vmatpush1.msra.mxu0 0.0
  %64 = vmatprep.subr.mxu0 0.0
  %65 = vmatpush1.msra.mxu0 0.0
  %66 = vmatprep.subr.mxu0 0.0
  %67 = vmatpush1.msra.mxu0 0.0
  %68 = vmatprep.subr.mxu0 0.0
  %69 = vmatpush1.msra.mxu0 0.0
  %70 = vmatprep.subr.mxu0 0.0
  %71 = vmatpush1.msra.mxu0 0.0
  %72 = vmatprep.subr.mxu0 0.0
  %73 = vmatpush1.msra.mxu0 0.0
  %74 = vmatprep.subr.mxu0 0.0
  %75 = vmatpush1.msra.mxu0 0.0
  %76 = vmatprep.subr.mxu0 0.0
  %77 = vmatpush1.msra.mxu0 0.0
  %78 = vmatprep.subr.mxu0 0.0
  %79 = vmatpush1.msra.mxu0 0.0
  %80 = vmatprep.subr.mxu0 0.0
  %81 = vmatpush1.msra.mxu0 0.0
  %82 = vmatprep.subr.mxu0 0.0
  %83 = vmatpush1.msra.mxu0 0.0
  %84 = vmatprep.subr.mxu0 0.0
  %85 = vmatpush1.msra.mxu0 0.0
  %86 = vmatprep.subr.mxu0 0.0
  %87 = vmatpush1.msra.mxu0 0.0
  %88 = vmatprep.subr.mxu0 0.0
  %89 = vmatpush1.msra.mxu0 0.0
  %90 = vmatprep.subr.mxu0 0.0
  %91 = vmatpush1.msra.mxu0 0.0
  %92 = vmatprep.subr.mxu0 0.0
  %93 = vmatpush1.msra.mxu0 0.0
  %94 = vmatprep.subr.mxu0 0.0
  %95 = vmatpush1.msra.mxu0 0.0
  %96 = vmatprep.subr.mxu0 0.0
  %97 = vmatpush1.msra.mxu0 0.0
  %98 = vmatprep.mubr.f32.mxu0 0.0
  %99 = vmatmul.mubr.f32.gmra.mrb[0].mxu0 %v32
  %v100 = vpop.f32.mrb[0].mxu0
  %v101 = vadd.f32 %v28, %v100
  %v102 = vpop.f32.mrb[0].mxu0
  %103 = vdwg.mxu0
  %v104 = vmax.f32 %v101, 0.0
  %v105 = vld [vmem:[%s3] sm:$0xff]
  %v106 = vld [vmem:[%s3 + $0x8] sm:$0xff]
  %v107 = vld [vmem:[%s3 + $0x10] sm:$0xff]
  %v108 = vld [vmem:[%s3 + $0x18] sm:$0xff]
  %v109 = vld [vmem:[%s3 + $0x20] sm:$0xff]
  %v110 = vld [vmem:[%s3 + $0x28] sm:$0xff]
  %v111 = vld [vmem:[%s3 + $0x30] sm:$0xff]
  %v112 = vld [vmem:[%s3 + $0x38] sm:$0xff]
  %v113 = vld [vmem:[%s4] sm:$0x1]
  %v115 = vlaneseq
  %v116 = vshrl.u32 %v115, 7
  %v117 = vsub.s32 0, %v116
  %v118 = vrot.slane %v113, %v117
  %vm120 = vcmask 523264
  %v122 = vsel %vm120, %v104, 0
  %124 = vmatprep.subr.mxu0 0.0
  %125 = vmatpush1.msra.mxu0 %v105
  %126 = vmatprep.subr.mxu0 0.0
  %127 = vmatpush1.msra.mxu0 %v106
  %128 = vmatprep.subr.mxu0 0.0
  %129 = vmatpush1.msra.mxu0 %v107
  %130 = vmatprep.subr.mxu0 0.0
  %131 = vmatpush1.msra.mxu0 %v108
  %132 = vmatprep.subr.mxu0 0.0
  %133 = vmatpush1.msra.mxu0 %v109
  %134 = vmatprep.subr.mxu0 0.0
  %135 = vmatpush1.msra.mxu0 %v110
  %136 = vmatprep.subr.mxu0 0.0
  %137 = vmatpush1.msra.mxu0 %v111
  %138 = vmatprep.subr.mxu0 0.0
  %139 = vmatpush1.msra.mxu0 %v112
  %140 = vmatprep.subr.mxu0 0.0
  %141 = vmatpush1.msra.mxu0 0.0
  %142 = vmatprep.subr.mxu0 0.0
  %143 = vmatpush1.msra.mxu0 0.0
  %144 = vmatprep.subr.mxu0 0.0
  %145 = vmatpush1.msra.mxu0 0.0
  %146 = vmatprep.subr.mxu0 0.0
  %147 = vmatpush1.msra.mxu0 0.0
  %148 = vmatprep.subr.mxu0 0.0
  %149 = vmatpush1.msra.mxu0 0.0
  %150 = vmatprep.subr.mxu0 0.0
  %151 = vmatpush1.msra.mxu0 0.0
  %152 = vmatprep.subr.mxu0 0.0
  %153 = vmatpush1.msra.mxu0 0.0
  %154 = vmatprep.subr.mxu0 0.0
  %155 = vmatpush1.msra.mxu0 0.0
  %156 = vmatprep.subr.mxu0 0.0
  %157 = vmatpush1.msra.mxu0 0.0
  %158 = vmatprep.subr.mxu0 0.0
  %159 = vmatpush1.msra.mxu0 0.0
  %160 = vmatprep.subr.mxu0 0.0
  %161 = vmatpush1.msra.mxu0 0.0
  %162 = vmatprep.subr.mxu0 0.0
  %163 = vmatpush1.msra.mxu0 0.0
  %164 = vmatprep.subr.mxu0 0.0
  %165 = vmatpush1.msra.mxu0 0.0
  %166 = vmatprep.subr.mxu0 0.0
  %167 = vmatpush1.msra.mxu0 0.0
  %168 = vmatprep.subr.mxu0 0.0
  %169 = vmatpush1.msra.mxu0 0.0
  %170 = vmatprep.subr.mxu0 0.0
  %171 = vmatpush1.msra.mxu0 0.0
  %172 = vmatprep.subr.mxu0 0.0
  %173 = vmatpush1.msra.mxu0 0.0
  %174 = vmatprep.subr.mxu0 0.0
  %175 = vmatpush1.msra.mxu0 0.0
  %176 = vmatprep.subr.mxu0 0.0
  %177 = vmatpush1.msra.mxu0 0.0
  %178 = vmatprep.subr.mxu0 0.0
  %179 = vmatpush1.msra.mxu0 0.0
  %180 = vmatprep.subr.mxu0 0.0
  %181 = vmatpush1.msra.mxu0 0.0
  %182 = vmatprep.subr.mxu0 0.0
  %183 = vmatpush1.msra.mxu0 0.0
  %184 = vmatprep.subr.mxu0 0.0
  %185 = vmatpush1.msra.mxu0 0.0
  %186 = vmatprep.subr.mxu0 0.0
  %187 = vmatpush1.msra.mxu0 0.0
  %188 = vmatprep.mubr.f32.mxu0 0.0
  %189 = vmatmul.mubr.f32.gmra.mrb[0].mxu0 %v122
  %v190 = vpop.f32.mrb[0].mxu0
  %v191 = vadd.f32 %v118, %v190
  %v192 = vpop.f32.mrb[0].mxu0
  %193 = vdwg.mxu0
  %vm194 = vcmask 31744
  %195 = vst.msk [vmem:[%s5] sm:$0xff] %vm194, %v191
  // Predicated region
  $region22: #{priornet_forward.1} parent=0 // pred_check
    _
  $region23: #{priornet_forward.1} parent=0 // pred_check_branch
    %197 = sbr.rel (0) target = $region25
  $region24: #{priornet_forward.1} parent=0 // pred_region
    _
  $region25: #{priornet_forward.1} parent=0 // pred_fallthru
    _
  // Predicated region
  $region26: #{priornet_forward.1} parent=0 // pred_check
    _
  $region27: #{priornet_forward.1} parent=0 // pred_check_branch
    %199 = sbr.rel (0) target = $region29
  $region28: #{priornet_forward.1} parent=0 // pred_region
    _
  $region29: #{priornet_forward.1} parent=0 // pred_fallthru
    _

</llo_original>
